<compile_context>
chip_gen: v7x
topology: tpu7x:2x2x1
jax: 0.10.0
libtpu: 0.0.40
codegen_flags: <defaults>
</compile_context>

<pallas_src>
import jax
import jax.numpy as jnp
from jax.experimental import pallas as pl
from jax.experimental.pallas import tpu as pltpu


# ----------------------------------------------------------------------------
# Fused kernel: one grid step == one tile of (N*C) rows
# ----------------------------------------------------------------------------
def slam_kernel(x_ref, wf_ref, b1_ref, w2_ref, b2_ref, o_ref):
    """
    x_ref : (tile_m, H*W)  flattened original-resolution feature rows (lane-dense)
    wf_ref: (H*W, HID)     fused weight = kron(A, B)^T @ W1^T  (resize folded in)
    b1_ref: (1, HID)
    w2_ref: (1, HID)       Linear(HID, 1) weight as a row vector
    b2_ref: (1, 1)
    o_ref : (tile_m, H*W)
    """
    x = x_ref[...]                                                       # (tile_m, H*W)

    # Resize + Linear(S*S -> HID) as ONE MXU pass (resize folded into W_fused), + ReLU.
    h1 = jnp.dot(x, wf_ref[...], preferred_element_type=jnp.float32)    # (tile_m, HID)
    h1 = jnp.maximum(h1 + b1_ref[...], 0.0)

    # Linear(HID -> 1) as a lane reduction (avoids a 1-wide MXU op), + Sigmoid.
    logit = jnp.sum(h1 * w2_ref[...], axis=1, keepdims=True) + b2_ref[...]  # (tile_m, 1)
    score = jax.nn.sigmoid(logit)                                        # (tile_m, 1)

    # Spatial attention: scale the ORIGINAL-resolution feature rows by the score.
    o_ref[...] = (x * score).astype(o_ref.dtype)


# ----------------------------------------------------------------------------
# Helpers + wrapper
# ----------------------------------------------------------------------------
def _interp_matrix(out_size: int, in_size: int) -> jnp.ndarray:
    """Bilinear interpolation matrix (out_size, in_size), align_corners=True.

    Exactly the identity when out_size == in_size.
    """
    i = jnp.arange(out_size, dtype=jnp.float32)
    if out_size > 1:
        src = i * (in_size - 1) / (out_size - 1)
    else:
        src = jnp.zeros_like(i)
    i0 = jnp.clip(jnp.floor(src).astype(jnp.int32), 0, in_size - 1)
    i1 = jnp.clip(i0 + 1, 0, in_size - 1)
    frac = src - i0.astype(jnp.float32)
    M = jnp.zeros((out_size, in_size), dtype=jnp.float32)
    M = M.at[jnp.arange(out_size), i0].add(1.0 - frac)
    M = M.at[jnp.arange(out_size), i1].add(frac)
    return M


def _round_up(a: int, b: int) -> int:
    return ((a + b - 1) // b) * b


def slam_forward(feature, w1, b1, w2, b2, spatial_dim):
    """feature: (N, C, H, W) f32. w1: (HID, S*S), b1: (HID,), w2: (1, HID), b2: (1,)."""
    N, C, H, W = feature.shape
    S = spatial_dim
    HID = w1.shape[0]
    HW = H * W
    M = N * C

    # --- Host-side, data-independent preprocessing -------------------------
    w1t = w1.T.astype(jnp.float32)                      # (S*S, HID)
    if H == S and W == S:
        # No-resize branch of the module: skip the fold (and any identity matmul).
        w_fused = w1t                                   # (H*W, HID)
    else:
        A = _interp_matrix(S, H)                        # (S, H) height interp
        B = _interp_matrix(S, W)                        # (S, W) width interp
        kab_t = jnp.kron(A, B).T                        # (H*W, S*S), row-major flatten
        # One-time fold; HIGHEST precision so folding adds no extra error.
        w_fused = jnp.matmul(kab_t, w1t, precision=jax.lax.Precision.HIGHEST)

    b1_2d = b1.reshape(1, HID).astype(jnp.float32)
    w2_2d = w2.reshape(1, HID).astype(jnp.float32)
    b2_2d = b2.reshape(1, 1).astype(jnp.float32)

    # --- Fuse N*C into one tiled M dimension --------------------------------
    x_flat = feature.reshape(M, HW).astype(jnp.float32)   # lane-dense last dim = H*W

    # Row tile: multiple of 8, up to 512 rows, capped so double-buffered I/O
    # stays within a v7x-friendly VMEM budget (~24 MiB of the 64 MiB).
    io_budget = 24 * 1024 * 1024
    max_rows_by_vmem = max(8, (io_budget // (HW * 4 * 4)) // 8 * 8)
    tile_m = int(min(512, max_rows_by_vmem, _round_up(M, 8)))
    M_pad = _round_up(M, tile_m)
    if M_pad != M:
        x_flat = jnp.pad(x_flat, ((0, M_pad - M), (0, 0)))

    # Explicit scoped-VMEM request: tile I/O (double-buffered) + resident weights.
    io_bytes = tile_m * HW * 4 * 2 * 2
    weight_bytes = (HW * HID + 2 * HID + 1) * 4 * 2
    vmem_limit = int(min(64 * 1024 * 1024,
                         max(32 * 1024 * 1024, (io_bytes + weight_bytes) * 3 // 2)))

    out_flat = pl.pallas_call(
        slam_kernel,
        out_shape=jax.ShapeDtypeStruct((M_pad, HW), jnp.float32),
        grid=(M_pad // tile_m,),
        in_specs=[
            pl.BlockSpec((tile_m, HW), lambda i: (i, 0)),   # feature row tile
            pl.BlockSpec((HW, HID), lambda i: (0, 0)),      # fused W (resident)
            pl.BlockSpec((1, HID), lambda i: (0, 0)),       # b1   (resident)
            pl.BlockSpec((1, HID), lambda i: (0, 0)),       # W2   (resident)
            pl.BlockSpec((1, 1), lambda i: (0, 0)),         # b2   (resident)
        ],
        out_specs=pl.BlockSpec((tile_m, HW), lambda i: (i, 0)),
        compiler_params=pltpu.CompilerParams(
            dimension_semantics=("parallel",),              # shard M tiles across TCs
            vmem_limit_bytes=vmem_limit),
    )(x_flat, w_fused, b1_2d, w2_2d, b2_2d)

    return out_flat[:M].reshape(N, C, H, W)


def reference(feature, w1, b1, w2, b2, spatial_dim):
    """Pure-JAX reference with the PyTorch module's semantics."""
    N, C, H, W = feature.shape
    S = spatial_dim
    if H != S:
        A = _interp_matrix(S, H)
        B = _interp_matrix(S, W)
        x = jnp.einsum('sh,nchw,tw->ncst', A, feature, B)
    else:
        x = feature
    x = x.reshape(N, C, -1)                                    # (N, C, S*S)
    h1 = jnp.maximum(x @ w1.T + b1, 0.0)                       # (N, C, HID)
    logit = h1 @ w2.T + b2                                     # (N, C, 1)
    score = jax.nn.sigmoid(logit)[..., None]                   # (N, C, 1, 1)
    return feature * score


if __name__ == "__main__":
    # Small shapes consistent with the module: batch=2, channels=4, spatial 16x16,
    # hidden=512 (hard-coded by nn.Linear(spatial_dim**2, 512)).
    N, C, H, W = 2, 4, 16, 16
    HID = 512
    key = jax.random.PRNGKey(0)

    # Case 1: spatial_dim=8 -> exercises the bilinear-resize (folded) branch.
    S1 = 8
    kf, k1, kb1, k2, kb2, k1b, kb1b = jax.random.split(key, 7)
    feature = jax.random.normal(kf, (N, C, H, W), dtype=jnp.float32)
    w1 = jax.random.normal(k1, (HID, S1 ** 2), dtype=jnp.float32) * 0.1
    b1 = jax.random.normal(kb1, (HID,), dtype=jnp.float32) * 0.1
    w2 = jax.random.normal(k2, (1, HID), dtype=jnp.float32) * 0.05
    b2 = jax.random.normal(kb2, (1,), dtype=jnp.float32) * 0.1

    out = jax.block_until_ready(slam_forward(feature, w1, b1, w2, b2, S1))
    ref = reference(feature, w1, b1, w2, b2, S1)
    assert out.shape == (N, C, H, W)
    assert jnp.allclose(out, ref, atol=2e-2, rtol=2e-2), "mismatch (resize branch)"

    # Case 2: spatial_dim=16 -> exercises the no-resize (identity-skip) branch.
    S2 = 16
    w1b = jax.random.normal(k1b, (HID, S2 ** 2), dtype=jnp.float32) * 0.05
    b1b = jax.random.normal(kb1b, (HID,), dtype=jnp.float32) * 0.1

    out2 = jax.block_until_ready(slam_forward(feature, w1b, b1b, w2, b2, S2))
    ref2 = reference(feature, w1b, b1b, w2, b2, S2)
    assert out2.shape == (N, C, H, W)
    assert jnp.allclose(out2, ref2, atol=2e-2, rtol=2e-2), "mismatch (identity branch)"

    print("KERNEL_OK")
</pallas_src>

<mosaic_0001>
module attributes {stable_mosaic.version = 11 : i64} {
  func.func @slam_kernel(%arg0: i32, %arg1: memref<8x256xf32, #tpu.memory_space<vmem>>, %arg2: memref<256x512xf32, #tpu.memory_space<vmem>>, %arg3: memref<1x512xf32, #tpu.memory_space<vmem>>, %arg4: memref<1x512xf32, #tpu.memory_space<vmem>>, %arg5: memref<1x1xf32, #tpu.memory_space<vmem>>, %arg6: memref<8x256xf32, #tpu.memory_space<vmem>>) attributes {dimension_semantics = [#tpu.dimension_semantics<parallel>], iteration_bounds = array<i64: 1>, scalar_prefetch = 0 : i64, scratch_operands = 0 : i64, tpu.core_type = #tpu.core_type<tc>, window_params = [{transform_indices = @transform_0, window_bounds = array<i64: 8, 256>}, {pipeline_mode = #tpu.pipeline_mode<synchronous>, transform_indices = @transform_1, window_bounds = array<i64: 256, 512>}, {pipeline_mode = #tpu.pipeline_mode<synchronous>, transform_indices = @transform_2, window_bounds = array<i64: 1, 512>}, {pipeline_mode = #tpu.pipeline_mode<synchronous>, transform_indices = @transform_3, window_bounds = array<i64: 1, 512>}, {pipeline_mode = #tpu.pipeline_mode<synchronous>, transform_indices = @transform_4, window_bounds = array<i64: 1, 1>}, {transform_indices = @transform_5, window_bounds = array<i64: 8, 256>}]} {
    %c0 = arith.constant 0 : index
    %c0_0 = arith.constant 0 : index
    %0 = vector.load %arg1[%c0, %c0_0] : memref<8x256xf32, #tpu.memory_space<vmem>>, vector<8x256xf32>
    %c0_1 = arith.constant 0 : index
    %c0_2 = arith.constant 0 : index
    %1 = vector.load %arg2[%c0_1, %c0_2] : memref<256x512xf32, #tpu.memory_space<vmem>>, vector<256x512xf32>
    %cst = arith.constant dense<0.000000e+00> : vector<8x512xf32>
    %2 = tpu.matmul %0, %1, %cst {dimension_numbers = #tpu.dot_dimension_numbers<[1], [0], [0], [1], [0, 0, 1, 1], [], []>} : vector<8x256xf32>, vector<256x512xf32>, vector<8x512xf32> -> vector<8x512xf32>
    %c0_3 = arith.constant 0 : index
    %c0_4 = arith.constant 0 : index
    %3 = vector.load %arg3[%c0_3, %c0_4] : memref<1x512xf32, #tpu.memory_space<vmem>>, vector<1x512xf32>
    %4 = vector.broadcast %3 : vector<1x512xf32> to vector<8x512xf32>
    %5 = arith.addf %2, %4 : vector<8x512xf32>
    %cst_5 = arith.constant 0.000000e+00 : f32
    %6 = vector.broadcast %cst_5 : f32 to vector<8x512xf32>
    %7 = arith.maximumf %5, %6 : vector<8x512xf32>
    %c0_6 = arith.constant 0 : index
    %c0_7 = arith.constant 0 : index
    %8 = vector.load %arg4[%c0_6, %c0_7] : memref<1x512xf32, #tpu.memory_space<vmem>>, vector<1x512xf32>
    %9 = vector.broadcast %8 : vector<1x512xf32> to vector<8x512xf32>
    %10 = arith.mulf %7, %9 : vector<8x512xf32>
    %cst_8 = arith.constant dense<0.000000e+00> : vector<8xf32>
    %11 = vector.multi_reduction <add>, %10, %cst_8 [1] : vector<8x512xf32> to vector<8xf32>
    %12 = vector.shape_cast %11 : vector<8xf32> to vector<8x1xf32>
    %c0_9 = arith.constant 0 : index
    %c0_10 = arith.constant 0 : index
    %13 = vector.load %arg5[%c0_9, %c0_10] : memref<1x1xf32, #tpu.memory_space<vmem>>, vector<1x1xf32>
    %14 = vector.broadcast %13 : vector<1x1xf32> to vector<8x1xf32>
    %15 = arith.addf %12, %14 : vector<8x1xf32>
    %16 = arith.negf %15 : vector<8x1xf32>
    %17 = math.exp %16 : vector<8x1xf32>
    %cst_11 = arith.constant 1.000000e+00 : f32
    %18 = vector.broadcast %cst_11 : f32 to vector<8x1xf32>
    %19 = arith.addf %18, %17 : vector<8x1xf32>
    %20 = arith.divf %18, %19 : vector<8x1xf32>
    %21 = vector.broadcast %20 : vector<8x1xf32> to vector<8x256xf32>
    %22 = arith.mulf %0, %21 : vector<8x256xf32>
    %c0_12 = arith.constant 0 : index
    %c0_13 = arith.constant 0 : index
    %23 = vector.load %arg6[%c0_12, %c0_13] : memref<8x256xf32, #tpu.memory_space<vmem>>, vector<8x256xf32>
    tpu.vector_store %arg6[%c0_12, %c0_13], %22 {strides = array<i32>} : memref<8x256xf32, #tpu.memory_space<vmem>>, vector<8x256xf32>,
    return
  }
  func.func @transform_0(%arg0: i32) -> (i32, i32) {
    %c0_i32 = arith.constant 0 : i32
    %c0_i32_0 = arith.constant 0 : i32
    return %arg0, %c0_i32 : i32, i32
  }
  func.func @transform_1(%arg0: i32) -> (i32, i32) {
    %c0_i32 = arith.constant 0 : i32
    %c0_i32_0 = arith.constant 0 : i32
    %c0_i32_1 = arith.constant 0 : i32
    return %c0_i32, %c0_i32_0 : i32, i32
  }
  func.func @transform_2(%arg0: i32) -> (i32, i32) {
    %c0_i32 = arith.constant 0 : i32
    %c0_i32_0 = arith.constant 0 : i32
    %c0_i32_1 = arith.constant 0 : i32
    return %c0_i32, %c0_i32_0 : i32, i32
  }
  func.func @transform_3(%arg0: i32) -> (i32, i32) {
    %c0_i32 = arith.constant 0 : i32
    %c0_i32_0 = arith.constant 0 : i32
    %c0_i32_1 = arith.constant 0 : i32
    return %c0_i32, %c0_i32_0 : i32, i32
  }
  func.func @transform_4(%arg0: i32) -> (i32, i32) {
    %c0_i32 = arith.constant 0 : i32
    %c0_i32_0 = arith.constant 0 : i32
    %c0_i32_1 = arith.constant 0 : i32
    return %c0_i32, %c0_i32_0 : i32, i32
  }
  func.func @transform_5(%arg0: i32) -> (i32, i32) {
    %c0_i32 = arith.constant 0 : i32
    %c0_i32_0 = arith.constant 0 : i32
    return %arg0, %c0_i32 : i32, i32
  }
}

</mosaic_0001>

<llo_original>
// kernel: tpu_custom_call.1
$region0: #{tpu_custom_call.1}
  #allocation0 [shape = 'u32[]', space=smem, size = 0x4, offset = 0x4, fixed_abs, tag = 'smem constant byte address 0x4 - core index']
  #allocation1 [shape = 'u32[144,128]{1,0:T(1,128)}', space=vmem, size = 0x12000, scoped, tag = 'internal scratch']
  #allocation2 [shape = 'f32[1,1]{1,0:T(1,128)S(1)}', space=vmem, size = 0x200, scoped, tag = 'scoped memory for tpu_custom_call.1']
  %s0 = inlined_call_operand.hbm [shape: f32[8,256], index: 0, kind: input, shape index: {}]
  %s1 = inlined_call_operand.hbm [shape: f32[256,512], index: 1, kind: input, shape index: {}]
  %s2 = inlined_call_operand.vmem [shape: f32[1,512], index: 2, kind: input, shape index: {}]
  %s3 = inlined_call_operand.vmem [shape: f32[1,512], index: 3, kind: input, shape index: {}]
  %s4 = inlined_call_operand.<no memory space> [shape: f32[1,1], index: 4, kind: input, shape index: {}]
  %s5 = inlined_call_operand.hbm [shape: f32[8,256], index: 5, kind: output, shape index: {}]
  %s6 = sld [smem:[#allocation0]]
  $region38: #{tpu_custom_call.1} parent=0
    _
  %s8 = ssub.s32 1, %s6
  %s9 = scalar_select 0, %s8, %s6
  %v10 = vstv %s4
  %11 = vst [vmem:[#allocation2] sm:$0x1] %v10
  $region1: #{tpu_custom_call.1} parent=0
    #allocation3 [shape = 'u8[8192]{0}', space=vmem, size = 0x2000, scoped, tag = 'input window, operand 0, single buffered']
    #allocation4 [shape = 's32[1]{0}', space=sflag, size = 0x4, scoped, tag = 'scoped memory for tpu_custom_call.1']
    #allocation5 [shape = 's32[1]{0}', space=sflag, size = 0x4, scoped, tag = 'scoped memory for tpu_custom_call.1']
    #allocation6 [shape = 'u8[524288]{0}', space=vmem, size = 0x80000, scoped, tag = 'input window, operand 1, single buffered']
    #allocation7 [shape = 's32[1]{0}', space=sflag, size = 0x4, scoped, tag = 'scoped memory for tpu_custom_call.1']
    #allocation8 [shape = 'u8[8192]{0}', space=vmem, size = 0x2000, scoped, tag = 'output window, operand 0, single buffered']
    %12 = vsyncpa [#allocation4], 0
    %13 = vsyncpa [#allocation7], 0
    %14 = vsyncpa [#allocation5], 0
    // Predicated region
    $region2: #{tpu_custom_call.1} parent=1 // pred_check
      _
    $region3: #{tpu_custom_call.1} parent=1 // pred_check_branch
      %16 = sbr.rel (0) target = $region5
    $region4: #{tpu_custom_call.1} parent=1 // pred_region
      %s18 = ssub.s32 256, 256
      %19 = vsyncadd [#allocation4], %s18
      %s21 = sshll.u32 [#allocation3], 4
      %s22 = int_to_ptr.vmem [resolvable:$true] %s21
      %24 = dma.hbm_to_vmem [thread:$0]  %s0, 256, %s22, [#allocation4]
    $region5: #{tpu_custom_call.1} parent=1 // pred_fallthru
      _
    // Predicated region
    $region6: #{tpu_custom_call.1} parent=1 // pred_check
      _
    $region7: #{tpu_custom_call.1} parent=1 // pred_check_branch
      %26 = sbr.rel (0) target = $region9
    $region8: #{tpu_custom_call.1} parent=1 // pred_region
      %s28 = ssub.s32 16384, 16384
      %29 = vsyncadd [#allocation7], %s28
      %s30 = sshll.u32 [#allocation6], 4
      %s31 = int_to_ptr.vmem [resolvable:$true] %s30
      %36 = dma.hbm_to_vmem [thread:$0]  %s1, 16384, %s31, [#allocation7], 512, 512, 32
    $region9: #{tpu_custom_call.1} parent=1 // pred_fallthru
      _
    // Predicated region
    $region10: #{tpu_custom_call.1} parent=1 // pred_check
      _
    $region11: #{tpu_custom_call.1} parent=1 // pred_check_branch
      %38 = sbr.rel (0) target = $region13
    $region12: #{tpu_custom_call.1} parent=1 // pred_region
      _
    $region13: #{tpu_custom_call.1} parent=1 // pred_fallthru
      _
    // Predicated region
    $region14: #{tpu_custom_call.1} parent=1 // pred_check
      _
    $region15: #{tpu_custom_call.1} parent=1 // pred_check_branch
      %40 = sbr.rel (0) target = $region17
    $region16: #{tpu_custom_call.1} parent=1 // pred_region
      _
    $region17: #{tpu_custom_call.1} parent=1 // pred_fallthru
      _
    // Predicated region
    $region18: #{tpu_custom_call.1} parent=1 // pred_check
      _
    $region19: #{tpu_custom_call.1} parent=1 // pred_check_branch
      %42 = sbr.rel (0) target = $region21
    $region20: #{tpu_custom_call.1} parent=1 // pred_region
      _
    $region21: #{tpu_custom_call.1} parent=1 // pred_fallthru
      _
    // Predicated region
    $region22: #{tpu_custom_call.1} parent=1 // pred_check
      _
    $region23: #{tpu_custom_call.1} parent=1 // pred_check_branch
      %44 = sbr.rel (0) target = $region25
    $region24: #{tpu_custom_call.1} parent=1 // pred_region
      %45 = dma.done [#allocation4], 256
    $region25: #{tpu_custom_call.1} parent=1 // pred_fallthru
      _
    // Predicated region
    $region26: #{tpu_custom_call.1} parent=1 // pred_check
      _
    $region27: #{tpu_custom_call.1} parent=1 // pred_check_branch
      %47 = sbr.rel (0) target = $region29
    $region28: #{tpu_custom_call.1} parent=1 // pred_region
      %48 = dma.done [#allocation7], 16384
    $region29: #{tpu_custom_call.1} parent=1 // pred_fallthru
      _
    %v49 = vld [vmem:[#allocation3] sm:$0xff]
    %v50 = vld [vmem:[#allocation3 + $0x8] sm:$0xff]
    %v51 = vld [vmem:[#allocation6] sm:$0xff]
    %v52 = vld [vmem:[#allocation6 + $0x8] sm:$0xff]
    %v53 = vld [vmem:[#allocation6 + $0x10] sm:$0xff]
    %v54 = vld [vmem:[#allocation6 + $0x18] sm:$0xff]
    %v55 = vld [vmem:[#allocation6 + $0x20] sm:$0xff]
    %v56 = vld [vmem:[#allocation6 + $0x28] sm:$0xff]
    %v57 = vld [vmem:[#allocation6 + $0x30] sm:$0xff]
    %v58 = vld [vmem:[#allocation6 + $0x38] sm:$0xff]
    %v59 = vld [vmem:[#allocation6 + $0x40] sm:$0xff]
    %v60 = vld [vmem:[#allocation6 + $0x48] sm:$0xff]
    %v61 = vld [vmem:[#allocation6 + $0x50] sm:$0xff]
    %v62 = vld [vmem:[#allocation6 + $0x58] sm:$0xff]
    %v63 = vld [vmem:[#allocation6 + $0x60] sm:$0xff]
    %v64 = vld [vmem:[#allocation6 + $0x68] sm:$0xff]
    %v65 = vld [vmem:[#allocation6 + $0x70] sm:$0xff]
    %v66 = vld [vmem:[#allocation6 + $0x78] sm:$0xff]
    %v67 = vld [vmem:[#allocation6 + $0x80] sm:$0xff]
    %v68 = vld [vmem:[#allocation6 + $0x88] sm:$0xff]
    %v69 = vld [vmem:[#allocation6 + $0x90] sm:$0xff]
    %v70 = vld [vmem:[#allocation6 + $0x98] sm:$0xff]
    %v71 = vld [vmem:[#allocation6 + $0xa0] sm:$0xff]
    %v72 = vld [vmem:[#allocation6 + $0xa8] sm:$0xff]
    %v73 = vld [vmem:[#allocation6 + $0xb0] sm:$0xff]
    %v74 = vld [vmem:[#allocation6 + $0xb8] sm:$0xff]
    %v75 = vld [vmem:[#allocation6 + $0xc0] sm:$0xff]
    %v76 = vld [vmem:[#allocation6 + $0xc8] sm:$0xff]
    %v77 = vld [vmem:[#allocation6 + $0xd0] sm:$0xff]
    %v78 = vld [vmem:[#allocation6 + $0xd8] sm:$0xff]
    %v79 = vld [vmem:[#allocation6 + $0xe0] sm:$0xff]
    %v80 = vld [vmem:[#allocation6 + $0xe8] sm:$0xff]
    %v81 = vld [vmem:[#allocation6 + $0xf0] sm:$0xff]
    %v82 = vld [vmem:[#allocation6 + $0xf8] sm:$0xff]
    %v83 = vld [vmem:[#allocation6 + $0x100] sm:$0xff]
    %v84 = vld [vmem:[#allocation6 + $0x108] sm:$0xff]
    %v85 = vld [vmem:[#allocation6 + $0x110] sm:$0xff]
    %v86 = vld [vmem:[#allocation6 + $0x118] sm:$0xff]
    %v87 = vld [vmem:[#allocation6 + $0x120] sm:$0xff]
    %v88 = vld [vmem:[#allocation6 + $0x128] sm:$0xff]
    %v89 = vld [vmem:[#allocation6 + $0x130] sm:$0xff]
    %v90 = vld [vmem:[#allocation6 + $0x138] sm:$0xff]
    %v91 = vld [vmem:[#allocation6 + $0x140] sm:$0xff]
    %v92 = vld [vmem:[#allocation6 + $0x148] sm:$0xff]
    %v93 = vld [vmem:[#allocation6 + $0x150] sm:$0xff]
    %v94 = vld [vmem:[#allocation6 + $0x158] sm:$0xff]
    %v95 = vld [vmem:[#allocation6 + $0x160] sm:$0xff]
    %v96 = vld [vmem:[#allocation6 + $0x168] sm:$0xff]
    %v97 = vld [vmem:[#allocation6 + $0x170] sm:$0xff]
    %v98 = vld [vmem:[#allocation6 + $0x178] sm:$0xff]
    %v99 = vld [vmem:[#allocation6 + $0x180] sm:$0xff]
    %v100 = vld [vmem:[#allocation6 + $0x188] sm:$0xff]
    %v101 = vld [vmem:[#allocation6 + $0x190] sm:$0xff]
    %v102 = vld [vmem:[#allocation6 + $0x198] sm:$0xff]
    %v103 = vld [vmem:[#allocation6 + $0x1a0] sm:$0xff]
    %v104 = vld [vmem:[#allocation6 + $0x1a8] sm:$0xff]
    %v105 = vld [vmem:[#allocation6 + $0x1b0] sm:$0xff]
    %v106 = vld [vmem:[#allocation6 + $0x1b8] sm:$0xff]
    %v107 = vld [vmem:[#allocation6 + $0x1c0] sm:$0xff]
    %v108 = vld [vmem:[#allocation6 + $0x1c8] sm:$0xff]
    %v109 = vld [vmem:[#allocation6 + $0x1d0] sm:$0xff]
    %v110 = vld [vmem:[#allocation6 + $0x1d8] sm:$0xff]
    %v111 = vld [vmem:[#allocation6 + $0x1e0] sm:$0xff]
    %v112 = vld [vmem:[#allocation6 + $0x1e8] sm:$0xff]
    %v113 = vld [vmem:[#allocation6 + $0x1f0] sm:$0xff]
    %v114 = vld [vmem:[#allocation6 + $0x1f8] sm:$0xff]
    %v115 = vld [vmem:[#allocation6 + $0x200] sm:$0xff]
    %v116 = vld [vmem:[#allocation6 + $0x208] sm:$0xff]
    %v117 = vld [vmem:[#allocation6 + $0x210] sm:$0xff]
    %v118 = vld [vmem:[#allocation6 + $0x218] sm:$0xff]
    %v119 = vld [vmem:[#allocation6 + $0x220] sm:$0xff]
    %v120 = vld [vmem:[#allocation6 + $0x228] sm:$0xff]
    %v121 = vld [vmem:[#allocation6 + $0x230] sm:$0xff]
    %v122 = vld [vmem:[#allocation6 + $0x238] sm:$0xff]
    %v123 = vld [vmem:[#allocation6 + $0x240] sm:$0xff]
    %v124 = vld [vmem:[#allocation6 + $0x248] sm:$0xff]
    %v125 = vld [vmem:[#allocation6 + $0x250] sm:$0xff]
    %v126 = vld [vmem:[#allocation6 + $0x258] sm:$0xff]
    %v127 = vld [vmem:[#allocation6 + $0x260] sm:$0xff]
    %v128 = vld [vmem:[#allocation6 + $0x268] sm:$0xff]
    %v129 = vld [vmem:[#allocation6 + $0x270] sm:$0xff]
    %v130 = vld [vmem:[#allocation6 + $0x278] sm:$0xff]
    %v131 = vld [vmem:[#allocation6 + $0x280] sm:$0xff]
    %v132 = vld [vmem:[#allocation6 + $0x288] sm:$0xff]
    %v133 = vld [vmem:[#allocation6 + $0x290] sm:$0xff]
    %v134 = vld [vmem:[#allocation6 + $0x298] sm:$0xff]
    %v135 = vld [vmem:[#allocation6 + $0x2a0] sm:$0xff]
    %v136 = vld [vmem:[#allocation6 + $0x2a8] sm:$0xff]
    %v137 = vld [vmem:[#allocation6 + $0x2b0] sm:$0xff]
    %v138 = vld [vmem:[#allocation6 + $0x2b8] sm:$0xff]
    %v139 = vld [vmem:[#allocation6 + $0x2c0] sm:$0xff]
    %v140 = vld [vmem:[#allocation6 + $0x2c8] sm:$0xff]
    %v141 = vld [vmem:[#allocation6 + $0x2d0] sm:$0xff]
    %v142 = vld [vmem:[#allocation6 + $0x2d8] sm:$0xff]
    %v143 = vld [vmem:[#allocation6 + $0x2e0] sm:$0xff]
    %v144 = vld [vmem:[#allocation6 + $0x2e8] sm:$0xff]
    %v145 = vld [vmem:[#allocation6 + $0x2f0] sm:$0xff]
    %v146 = vld [vmem:[#allocation6 + $0x2f8] sm:$0xff]
    %v147 = vld [vmem:[#allocation6 + $0x300] sm:$0xff]
    %v148 = vld [vmem:[#allocation6 + $0x308] sm:$0xff]
    %v149 = vld [vmem:[#allocation6 + $0x310] sm:$0xff]
    %v150 = vld [vmem:[#allocation6 + $0x318] sm:$0xff]
    %v151 = vld [vmem:[#allocation6 + $0x320] sm:$0xff]
    %v152 = vld [vmem:[#allocation6 + $0x328] sm:$0xff]
    %v153 = vld [vmem:[#allocation6 + $0x330] sm:$0xff]
    %v154 = vld [vmem:[#allocation6 + $0x338] sm:$0xff]
    %v155 = vld [vmem:[#allocation6 + $0x340] sm:$0xff]
    %v156 = vld [vmem:[#allocation6 + $0x348] sm:$0xff]
    %v157 = vld [vmem:[#allocation6 + $0x350] sm:$0xff]
    %v158 = vld [vmem:[#allocation6 + $0x358] sm:$0xff]
    %v159 = vld [vmem:[#allocation6 + $0x360] sm:$0xff]
    %v160 = vld [vmem:[#allocation6 + $0x368] sm:$0xff]
    %v161 = vld [vmem:[#allocation6 + $0x370] sm:$0xff]
    %v162 = vld [vmem:[#allocation6 + $0x378] sm:$0xff]
    %v163 = vld [vmem:[#allocation6 + $0x380] sm:$0xff]
    %v164 = vld [vmem:[#allocation6 + $0x388] sm:$0xff]
    %v165 = vld [vmem:[#allocation6 + $0x390] sm:$0xff]
    %v166 = vld [vmem:[#allocation6 + $0x398] sm:$0xff]
    %v167 = vld [vmem:[#allocation6 + $0x3a0] sm:$0xff]
    %v168 = vld [vmem:[#allocation6 + $0x3a8] sm:$0xff]
    %v169 = vld [vmem:[#allocation6 + $0x3b0] sm:$0xff]
    %v170 = vld [vmem:[#allocation6 + $0x3b8] sm:$0xff]
    %v171 = vld [vmem:[#allocation6 + $0x3c0] sm:$0xff]
    %v172 = vld [vmem:[#allocation6 + $0x3c8] sm:$0xff]
    %v173 = vld [vmem:[#allocation6 + $0x3d0] sm:$0xff]
    %v174 = vld [vmem:[#allocation6 + $0x3d8] sm:$0xff]
    %v175 = vld [vmem:[#allocation6 + $0x3e0] sm:$0xff]
    %v176 = vld [vmem:[#allocation6 + $0x3e8] sm:$0xff]
    %v177 = vld [vmem:[#allocation6 + $0x3f0] sm:$0xff]
    %v178 = vld [vmem:[#allocation6 + $0x3f8] sm:$0xff]
    %v179 = vld [vmem:[%s2] sm:$0xf]
    %v181 = vlaneseq
    %v182 = vshrl.u32 %v181, 7
    %v183 = vsub.s32 0, %v182
    %v184 = vrot.slane %v179, %v183
    %v185 = vlaneseq
    %v186 = vshrl.u32 %v185, 7
    %v187 = vsub.s32 1, %v186
    %v188 = vrot.slane %v179, %v187
    %v189 = vlaneseq
    %v190 = vshrl.u32 %v189, 7
    %v191 = vsub.s32 2, %v190
    %v192 = vrot.slane %v179, %v191
    %v193 = vlaneseq
    %v194 = vshrl.u32 %v193, 7
    %v195 = vsub.s32 3, %v194
    %v196 = vrot.slane %v179, %v195
    %201 = vmatprep.subr.mxu0 %v52
    %202 = vmatpush1.msra.mxu0 %v51
    %203 = vmatprep.subr.mxu0 %v56
    %204 = vmatpush1.msra.mxu0 %v55
    %205 = vmatprep.subr.mxu0 %v60
    %206 = vmatpush1.msra.mxu0 %v59
    %207 = vmatprep.subr.mxu0 %v64
    %208 = vmatpush1.msra.mxu0 %v63
    %209 = vmatprep.subr.mxu0 %v68
    %210 = vmatpush1.msra.mxu0 %v67
    %211 = vmatprep.subr.mxu0 %v72
    %212 = vmatpush1.msra.mxu0 %v71
    %213 = vmatprep.subr.mxu0 %v76
    %214 = vmatpush1.msra.mxu0 %v75
    %215 = vmatprep.subr.mxu0 %v80
    %216 = vmatpush1.msra.mxu0 %v79
    %217 = vmatprep.subr.mxu0 %v84
    %218 = vmatpush1.msra.mxu0 %v83
    %219 = vmatprep.subr.mxu0 %v88
    %220 = vmatpush1.msra.mxu0 %v87
    %221 = vmatprep.subr.mxu0 %v92
    %222 = vmatpush1.msra.mxu0 %v91
    %223 = vmatprep.subr.mxu0 %v96
    %224 = vmatpush1.msra.mxu0 %v95
    %225 = vmatprep.subr.mxu0 %v100
    %226 = vmatpush1.msra.mxu0 %v99
    %227 = vmatprep.subr.mxu0 %v104
    %228 = vmatpush1.msra.mxu0 %v103
    %229 = vmatprep.subr.mxu0 %v108
    %230 = vmatpush1.msra.mxu0 %v107
    %231 = vmatprep.subr.mxu0 %v112
    %232 = vmatpush1.msra.mxu0 %v111
    %233 = vmatprep.subr.mxu0 %v116
    %234 = vmatpush1.msra.mxu0 %v115
    %235 = vmatprep.subr.mxu0 %v120
    %236 = vmatpush1.msra.mxu0 %v119
    %237 = vmatprep.subr.mxu0 %v124
    %238 = vmatpush1.msra.mxu0 %v123
    %239 = vmatprep.subr.mxu0 %v128
    %240 = vmatpush1.msra.mxu0 %v127
    %241 = vmatprep.subr.mxu0 %v132
    %242 = vmatpush1.msra.mxu0 %v131
    %243 = vmatprep.subr.mxu0 %v136
    %244 = vmatpush1.msra.mxu0 %v135
    %245 = vmatprep.subr.mxu0 %v140
    %246 = vmatpush1.msra.mxu0 %v139
    %247 = vmatprep.subr.mxu0 %v144
    %248 = vmatpush1.msra.mxu0 %v143
    %249 = vmatprep.subr.mxu0 %v148
    %250 = vmatpush1.msra.mxu0 %v147
    %251 = vmatprep.subr.mxu0 %v152
    %252 = vmatpush1.msra.mxu0 %v151
    %253 = vmatprep.subr.mxu0 %v156
    %254 = vmatpush1.msra.mxu0 %v155
    %255 = vmatprep.subr.mxu0 %v160
    %256 = vmatpush1.msra.mxu0 %v159
    %257 = vmatprep.subr.mxu0 %v164
    %258 = vmatpush1.msra.mxu0 %v163
    %259 = vmatprep.subr.mxu0 %v168
    %260 = vmatpush1.msra.mxu0 %v167
    %261 = vmatprep.subr.mxu0 %v172
    %262 = vmatpush1.msra.mxu0 %v171
    %263 = vmatprep.subr.mxu0 %v176
    %264 = vmatpush1.msra.mxu0 %v175
    %265 = vmatprep.mubr.f32.mxu0 %v50
    %266 = vmatmul.mubr.f32.gmra.mrb[0].mxu0 %v49
    %v267 = vpop.f32.mrb[0].mxu0
    %v268 = vadd.f32 %v184, %v267
    %v269 = vpop.f32.mrb[0].mxu0
    %v270 = vadd.f32 %v188, %v269
    %271 = vdwg.mxu0
    %272 = vmatprep.subr.mxu0 %v54
    %273 = vmatpush1.msra.mxu0 %v53
    %274 = vmatprep.subr.mxu0 %v58
    %275 = vmatpush1.msra.mxu0 %v57
    %276 = vmatprep.subr.mxu0 %v62
    %277 = vmatpush1.msra.mxu0 %v61
    %278 = vmatprep.subr.mxu0 %v66
    %279 = vmatpush1.msra.mxu0 %v65
    %280 = vmatprep.subr.mxu0 %v70
    %281 = vmatpush1.msra.mxu0 %v69
    %282 = vmatprep.subr.mxu0 %v74
    %283 = vmatpush1.msra.mxu0 %v73
    %284 = vmatprep.subr.mxu0 %v78
    %285 = vmatpush1.msra.mxu0 %v77
    %286 = vmatprep.subr.mxu0 %v82
    %287 = vmatpush1.msra.mxu0 %v81
    %288 = vmatprep.subr.mxu0 %v86
    %289 = vmatpush1.msra.mxu0 %v85
    %290 = vmatprep.subr.mxu0 %v90
    %291 = vmatpush1.msra.mxu0 %v89
    %292 = vmatprep.subr.mxu0 %v94
    %293 = vmatpush1.msra.mxu0 %v93
    %294 = vmatprep.subr.mxu0 %v98
    %295 = vmatpush1.msra.mxu0 %v97
    %296 = vmatprep.subr.mxu0 %v102
    %297 = vmatpush1.msra.mxu0 %v101
    %298 = vmatprep.subr.mxu0 %v106
    %299 = vmatpush1.msra.mxu0 %v105
    %300 = vmatprep.subr.mxu0 %v110
    %301 = vmatpush1.msra.mxu0 %v109
    %302 = vmatprep.subr.mxu0 %v114
    %303 = vmatpush1.msra.mxu0 %v113
    %304 = vmatprep.subr.mxu0 %v118
    %305 = vmatpush1.msra.mxu0 %v117
    %306 = vmatprep.subr.mxu0 %v122
    %307 = vmatpush1.msra.mxu0 %v121
    %308 = vmatprep.subr.mxu0 %v126
    %309 = vmatpush1.msra.mxu0 %v125
    %310 = vmatprep.subr.mxu0 %v130
    %311 = vmatpush1.msra.mxu0 %v129
    %312 = vmatprep.subr.mxu0 %v134
    %313 = vmatpush1.msra.mxu0 %v133
    %314 = vmatprep.subr.mxu0 %v138
    %315 = vmatpush1.msra.mxu0 %v137
    %316 = vmatprep.subr.mxu0 %v142
    %317 = vmatpush1.msra.mxu0 %v141
    %318 = vmatprep.subr.mxu0 %v146
    %319 = vmatpush1.msra.mxu0 %v145
    %320 = vmatprep.subr.mxu0 %v150
    %321 = vmatpush1.msra.mxu0 %v149
    %322 = vmatprep.subr.mxu0 %v154
    %323 = vmatpush1.msra.mxu0 %v153
    %324 = vmatprep.subr.mxu0 %v158
    %325 = vmatpush1.msra.mxu0 %v157
    %326 = vmatprep.subr.mxu0 %v162
    %327 = vmatpush1.msra.mxu0 %v161
    %328 = vmatprep.subr.mxu0 %v166
    %329 = vmatpush1.msra.mxu0 %v165
    %330 = vmatprep.subr.mxu0 %v170
    %331 = vmatpush1.msra.mxu0 %v169
    %332 = vmatprep.subr.mxu0 %v174
    %333 = vmatpush1.msra.mxu0 %v173
    %334 = vmatprep.subr.mxu0 %v178
    %335 = vmatpush1.msra.mxu0 %v177
    %336 = vmatprep.mubr.f32.mxu0 %v50
    %337 = vmatmul.mubr.f32.gmra.mrb[0].mxu0 %v49
    %v338 = vpop.f32.mrb[0].mxu0
    %v339 = vadd.f32 %v192, %v338
    %v340 = vpop.f32.mrb[0].mxu0
    %v341 = vadd.f32 %v196, %v340
    %342 = vdwg.mxu0
    %v343 = vmax.f32 %v268, 0.0
    %v344 = vmax.f32 %v270, 0.0
    %v345 = vmax.f32 %v339, 0.0
    %v346 = vmax.f32 %v341, 0.0
    %v347 = vld [vmem:[%s3] sm:$0xf]
    %v349 = vlaneseq
    %v350 = vshrl.u32 %v349, 7
    %v351 = vsub.s32 0, %v350
    %v352 = vrot.slane %v347, %v351
    %v353 = vlaneseq
    %v354 = vshrl.u32 %v353, 7
    %v355 = vsub.s32 1, %v354
    %v356 = vrot.slane %v347, %v355
    %v357 = vlaneseq
    %v358 = vshrl.u32 %v357, 7
    %v359 = vsub.s32 2, %v358
    %v360 = vrot.slane %v347, %v359
    %v361 = vlaneseq
    %v362 = vshrl.u32 %v361, 7
    %v363 = vsub.s32 3, %v362
    %v364 = vrot.slane %v347, %v363
    %v369 = vmul.f32 %v343, %v352
    %v370 = vmul.f32 %v344, %v356
    %v371 = vmul.f32 %v345, %v360
    %v372 = vmul.f32 %v346, %v364
    %v373 = vadd.f32 %v369, %v370
    %v374 = vadd.f32 %v373, %v371
    %v375 = vadd.f32 %v374, %v372
    %376 = vadd.xlane.f32.xlu0 %v375
    %v377 = vpop.xlane.xlu0 %376
    %v378 = vld [vmem:[#allocation2] sm:$0x1]
    %v380 = vlaneseq
    %v381 = vshrl.u32 %v380, 7
    %v382 = vsub.s32 0, %v381
    %v383 = vrot.slane %v378, %v382
    %v385 = vadd.f32 %v377, %v383
    %v386 = vxor.u32 %v385, 2147483648
    %v387 = vmul.f32 %v386, 1.442695
    %v388 = vpow.pop %v387
    %v389 = vadd.f32 %v388, 1.0
    %v390 = vrcp.pop %v389
    %v391 = vmul.f32 1.0, %v390
    %393 = vset.pattern.permute.xlu0 0
    %394 = vperm.xlu0 %393, %v391
    %v395 = vpop.permute.xlu0 %394
    %v397 = vmul.f32 %v49, %v395
    %v398 = vmul.f32 %v50, %v395
    %399 = vst [vmem:[#allocation8] sm:$0xff] %v397
    %400 = vst [vmem:[#allocation8 + $0x8] sm:$0xff] %v398
    // Predicated region
    $region30: #{tpu_custom_call.1} parent=1 // pred_check
      _
    $region31: #{tpu_custom_call.1} parent=1 // pred_check_branch
      %402 = sbr.rel (0) target = $region33
    $region32: #{tpu_custom_call.1} parent=1 // pred_region
      %s404 = ssub.s32 256, 256
      %405 = vsyncadd [#allocation5], %s404
      %s407 = sshll.u32 [#allocation8], 4
      %s408 = int_to_ptr.vmem [resolvable:$true] %s407
      %410 = dma.vmem_to_hbm [thread:$0]  %s408, 256, %s5, [#allocation5]
    $region33: #{tpu_custom_call.1} parent=1 // pred_fallthru
      _
    // Predicated region
    $region34: #{tpu_custom_call.1} parent=1 // pred_check
      _
    $region35: #{tpu_custom_call.1} parent=1 // pred_check_branch
      %412 = sbr.rel (0) target = $region37
    $region36: #{tpu_custom_call.1} parent=1 // pred_region
      %413 = dma.done [#allocation5], 256
    $region37: #{tpu_custom_call.1} parent=1 // pred_fallthru
      _
    %414 = vsyncpa [#allocation4], 1
    %415 = vsyncpa [#allocation7], 1
    %416 = vsyncpa [#allocation5], 1

</llo_original>
